<compile_context>
chip_gen: v5e
topology: v5e:2x2
jax: 0.10.0
libtpu: 0.0.40
codegen_flags: <defaults>
</compile_context>

<pallas_src>
import functools

import jax
import jax.numpy as jnp
from jax.experimental import pallas as pl
from jax.experimental.pallas import tpu as pltpu


# ---------------------------------------------------------------------------
# Kernel: reflection-pad one [c_blk, H, W] depth slice to [c_blk, H+2p, W+2p].
# The depth-replication source selection already happened in the index_map.
# ---------------------------------------------------------------------------
def _reflect_pad_hw_kernel(dmap_ref, x_ref, o_ref, *, ph, H, W):
    del dmap_ref  # only used by the index_maps (scalar prefetch)
    x = x_ref[...]  # [c_blk, H, W]
    if ph > 0:
        # Reflect along H (sublane axis): out row i (<ph) = in row ph-i ;
        # out row ph+H+j = in row H-2-j.  ph is a small static int (typically 1-3),
        # so these per-row slices + one concatenate are cheap and fully hidden
        # under the DMAs of this memory-bound kernel.
        top = [x[:, ph - i:ph - i + 1, :] for i in range(ph)]
        bot = [x[:, H - 2 - i:H - 1 - i, :] for i in range(ph)]
        xh = jnp.concatenate(top + [x] + bot, axis=1)            # [c_blk, H+2p, W]
        # Reflect along W (lane axis), same index rule.
        left = [xh[:, :, ph - j:ph - j + 1] for j in range(ph)]
        right = [xh[:, :, W - 2 - j:W - 1 - j] for j in range(ph)]
        out = jnp.concatenate(left + [xh] + right, axis=2)        # [c_blk, H+2p, W+2p]
    else:
        out = x
    o_ref[...] = out  # one full store of the whole output block


# ---------------------------------------------------------------------------
# Generation-aware block planning.
# ---------------------------------------------------------------------------
def _tpu_vmem_capacity_bytes():
    try:
        return int(pltpu.get_tpu_info().vmem_capacity_bytes)
    except Exception:
        return 128 << 20  # v5e / v6e default


def _plan_channel_blocking(C, H, W, Hout, Wout, itemsize):
    """Pick (c_blk, n_cb, vmem_limit_bytes).

    Live VMEM working set = double-buffered input block + double-buffered output
    block = 2 * c_blk * (H*W + Hout*Wout) * itemsize.  Keep that well under VMEM
    so the pipeline stays double-buffered, while making the DMAs as large as
    possible (this op's only throughput lever).
    """
    cap = _tpu_vmem_capacity_bytes()
    if cap <= (64 << 20):            # v7x-class core: 64 MiB VMEM per TensorCore
        live_budget = 28 << 20       # keep the 4 live buffers under ~half of VMEM
        vmem_limit = 48 << 20
    else:                            # v5e / v6e: 128 MiB VMEM
        live_budget = 48 << 20
        vmem_limit = 64 << 20

    bytes_per_channel = 2 * (H * W + Hout * Wout) * itemsize
    c_max = max(1, live_budget // bytes_per_channel)
    n_cb = pl.cdiv(C, min(C, c_max))
    c_blk = pl.cdiv(C, n_cb)         # balanced blocks; trailing partial block is clipped
    live = c_blk * bytes_per_channel
    # Make sure the scoped-VMEM limit actually covers what we allocate.
    vmem_limit = max(vmem_limit, min(live + (8 << 20), int(cap * 0.9)))
    return int(c_blk), int(n_cb), int(vmem_limit)


# ---------------------------------------------------------------------------
# Wrapper.
# ---------------------------------------------------------------------------
def reflection_pad3d(x, pad_D, pad_HW):
    """x: [1, C, D, H, W]  ->  [1, C, D+2*pad_D, H+2*pad_HW, W+2*pad_HW]."""
    assert x.shape[0] == 1, "ReflectionPad3D requires batch size 1"
    _, C, D, H, W = x.shape
    ph, pd = int(pad_HW), int(pad_D)
    assert 0 <= ph < H and ph < W, "reflection pad must be smaller than the spatial dims"
    assert pd >= 0

    Hout, Wout = H + 2 * ph, W + 2 * ph
    Dout = D + 2 * pd

    x3 = x[0]  # [C, D, H, W]
    itemsize = jnp.dtype(x.dtype).itemsize
    c_blk, n_cb, vmem_limit = _plan_channel_blocking(C, H, W, Hout, Wout, itemsize)

    # Depth replication ("edge" pad) folded into the input index_map.
    dmap = jnp.clip(jnp.arange(Dout, dtype=jnp.int32) - pd, 0, D - 1)

    grid_spec = pltpu.PrefetchScalarGridSpec(
        num_scalar_prefetch=1,
        grid=(n_cb, Dout),
        in_specs=[
            pl.BlockSpec(
                (c_blk, None, H, W),
                lambda cb, do, dmap_ref: (cb, dmap_ref[do], 0, 0),
            ),
        ],
        out_specs=pl.BlockSpec(
            (c_blk, None, Hout, Wout),
            lambda cb, do, dmap_ref: (cb, do, 0, 0),
        ),
    )

    # Pure-bandwidth op: tell XLA's scheduler exactly that.
    cost = pl.CostEstimate(
        flops=0,
        transcendentals=0,
        bytes_accessed=int((C * Dout * H * W + C * Dout * Hout * Wout) * itemsize),
    )

    out3 = pl.pallas_call(
        functools.partial(_reflect_pad_hw_kernel, ph=ph, H=H, W=W),
        out_shape=jax.ShapeDtypeStruct((C, Dout, Hout, Wout), x.dtype),
        grid_spec=grid_spec,
        compiler_params=pltpu.CompilerParams(
            dimension_semantics=("parallel", "parallel"),
            vmem_limit_bytes=vmem_limit,
        ),
        cost_estimate=cost,
    )(dmap, x3)

    return out3[None]  # restore the leading batch dim of 1


# ---------------------------------------------------------------------------
# Pure-JAX reference (matches PyTorch semantics) for verification.
# ---------------------------------------------------------------------------
def reference_forward(x, pad_D, pad_HW):
    y = jnp.pad(
        x, ((0, 0), (0, 0), (0, 0), (pad_HW, pad_HW), (pad_HW, pad_HW)), mode="reflect"
    )
    y = jnp.pad(y, ((0, 0), (0, 0), (pad_D, pad_D), (0, 0), (0, 0)), mode="edge")
    return y


if __name__ == "__main__":
    key = jax.random.PRNGKey(0)
    C, D, H, W = 4, 6, 16, 16
    pad_D, pad_HW = 2, 3

    x = jax.random.normal(key, (1, C, D, H, W), jnp.float32)

    out = jax.block_until_ready(reflection_pad3d(x, pad_D, pad_HW))
    ref = reference_forward(x, pad_D, pad_HW)

    assert out.shape == (1, C, D + 2 * pad_D, H + 2 * pad_HW, W + 2 * pad_HW), out.shape
    max_err = float(jnp.max(jnp.abs(out - ref)))
    assert max_err < 1e-6, f"mismatch vs reference: {max_err}"
    print("KERNEL_OK")
</pallas_src>

<mosaic_0001>
module attributes {stable_mosaic.version = 11 : i64} {
  func.func @_reflect_pad_hw_kernel(%arg0: i32, %arg1: i32, %arg2: memref<10xi32, #tpu.memory_space<smem>>, %arg3: memref<4x1x16x16xf32, #tpu.memory_space<vmem>>, %arg4: memref<4x1x22x22xf32, #tpu.memory_space<vmem>>) attributes {dimension_semantics = [#tpu.dimension_semantics<parallel>, #tpu.dimension_semantics<parallel>], iteration_bounds = array<i64: 1, 10>, scalar_prefetch = 1 : i64, scratch_operands = 0 : i64, tpu.core_type = #tpu.core_type<tc>, window_params = [{transform_indices = @transform_0, window_bounds = array<i64: 4, 1, 16, 16>}, {transform_indices = @transform_1, window_bounds = array<i64: 4, 1, 22, 22>}]} {
    %c0 = arith.constant 0 : index
    %c0_0 = arith.constant 0 : index
    %c0_1 = arith.constant 0 : index
    %c0_2 = arith.constant 0 : index
    %0 = vector.load %arg3[%c0, %c0_0, %c0_1, %c0_2] : memref<4x1x16x16xf32, #tpu.memory_space<vmem>>, vector<4x1x16x16xf32>
    %1 = vector.shape_cast %0 : vector<4x1x16x16xf32> to vector<4x16x16xf32>
    %2 = vector.extract_strided_slice %1 {offsets = [0, 3, 0], sizes = [4, 1, 16], strides = [1, 1, 1]} : vector<4x16x16xf32> to vector<4x1x16xf32>
    %3 = vector.extract_strided_slice %1 {offsets = [0, 2, 0], sizes = [4, 1, 16], strides = [1, 1, 1]} : vector<4x16x16xf32> to vector<4x1x16xf32>
    %4 = vector.extract_strided_slice %1 {offsets = [0, 1, 0], sizes = [4, 1, 16], strides = [1, 1, 1]} : vector<4x16x16xf32> to vector<4x1x16xf32>
    %5 = vector.extract_strided_slice %1 {offsets = [0, 14, 0], sizes = [4, 1, 16], strides = [1, 1, 1]} : vector<4x16x16xf32> to vector<4x1x16xf32>
    %6 = vector.extract_strided_slice %1 {offsets = [0, 13, 0], sizes = [4, 1, 16], strides = [1, 1, 1]} : vector<4x16x16xf32> to vector<4x1x16xf32>
    %7 = vector.extract_strided_slice %1 {offsets = [0, 12, 0], sizes = [4, 1, 16], strides = [1, 1, 1]} : vector<4x16x16xf32> to vector<4x1x16xf32>
    %8 = tpu.concatenate %2, %3, %4, %1, %5, %6, %7 in 1 : vector<4x1x16xf32>, vector<4x1x16xf32>, vector<4x1x16xf32>, vector<4x16x16xf32>, vector<4x1x16xf32>, vector<4x1x16xf32>, vector<4x1x16xf32> -> vector<4x22x16xf32>
    %9 = vector.extract_strided_slice %8 {offsets = [0, 0, 3], sizes = [4, 22, 1], strides = [1, 1, 1]} : vector<4x22x16xf32> to vector<4x22x1xf32>
    %10 = vector.extract_strided_slice %8 {offsets = [0, 0, 2], sizes = [4, 22, 1], strides = [1, 1, 1]} : vector<4x22x16xf32> to vector<4x22x1xf32>
    %11 = vector.extract_strided_slice %8 {offsets = [0, 0, 1], sizes = [4, 22, 1], strides = [1, 1, 1]} : vector<4x22x16xf32> to vector<4x22x1xf32>
    %12 = vector.extract_strided_slice %8 {offsets = [0, 0, 14], sizes = [4, 22, 1], strides = [1, 1, 1]} : vector<4x22x16xf32> to vector<4x22x1xf32>
    %13 = vector.extract_strided_slice %8 {offsets = [0, 0, 13], sizes = [4, 22, 1], strides = [1, 1, 1]} : vector<4x22x16xf32> to vector<4x22x1xf32>
    %14 = vector.extract_strided_slice %8 {offsets = [0, 0, 12], sizes = [4, 22, 1], strides = [1, 1, 1]} : vector<4x22x16xf32> to vector<4x22x1xf32>
    %15 = tpu.concatenate %9, %10, %11, %8, %12, %13, %14 in 2 : vector<4x22x1xf32>, vector<4x22x1xf32>, vector<4x22x1xf32>, vector<4x22x16xf32>, vector<4x22x1xf32>, vector<4x22x1xf32>, vector<4x22x1xf32> -> vector<4x22x22xf32>
    %c0_3 = arith.constant 0 : index
    %c0_4 = arith.constant 0 : index
    %c0_5 = arith.constant 0 : index
    %c0_6 = arith.constant 0 : index
    %16 = vector.load %arg4[%c0_3, %c0_4, %c0_5, %c0_6] : memref<4x1x22x22xf32, #tpu.memory_space<vmem>>, vector<4x1x22x22xf32>
    %17 = vector.shape_cast %16 : vector<4x1x22x22xf32> to vector<4x22x22xf32>
    %18 = vector.shape_cast %15 : vector<4x22x22xf32> to vector<4x1x22x22xf32>
    tpu.vector_store %arg4[%c0_3, %c0_4, %c0_5, %c0_6], %18 {strides = array<i32>} : memref<4x1x22x22xf32, #tpu.memory_space<vmem>>, vector<4x1x22x22xf32>,
    return
  }
  func.func @transform_0(%arg0: i32, %arg1: i32, %arg2: memref<10xi32, #tpu.memory_space<smem>>) -> (i32, i32, i32, i32) {
    %0 = arith.index_cast %arg1 : i32 to index
    %1 = memref.load %arg2[%0] : memref<10xi32, #tpu.memory_space<smem>>
    %c0_i32 = arith.constant 0 : i32
    %c0_i32_0 = arith.constant 0 : i32
    %c0_i32_1 = arith.constant 0 : i32
    return %arg0, %1, %c0_i32, %c0_i32_0 : i32, i32, i32, i32
  }
  func.func @transform_1(%arg0: i32, %arg1: i32, %arg2: memref<10xi32, #tpu.memory_space<smem>>) -> (i32, i32, i32, i32) {
    %c0_i32 = arith.constant 0 : i32
    %c0_i32_0 = arith.constant 0 : i32
    %c0_i32_1 = arith.constant 0 : i32
    return %arg0, %arg1, %c0_i32, %c0_i32_0 : i32, i32, i32, i32
  }
}

</mosaic_0001>

<llo_original>
// kernel: tpu_custom_call.1
$region0: #{tpu_custom_call.1}
  #allocation0 [shape = 'u32[]', space=smem, size = 0x4, offset = 0x4, fixed_abs, tag = 'smem constant byte address 0x4 - core index']
  #allocation1 [shape = 'u32[72,128]{1,0:T(1,128)}', space=vmem, size = 0x9000, scoped, tag = 'internal scratch']
  #allocation2 [shape = 's32[1]{0}', space=sflag, size = 0x4, scoped, tag = 'scoped memory for tpu_custom_call.1']
  #allocation3 [shape = 'u8[512]{0}', space=smem, size = 0x200, scoped, tag = 'prefetched SMEM operand 0']
  #allocation7 [shape = 's32[]', space=sflag, size = 0x4, offset = 0, fixed_abs, tag = 'sflag constant byte address 0x0 - dummy sync flag']
  %s0 = inlined_call_operand.hbm [shape: s32[10], index: 0, kind: input, shape index: {}]
  %s1 = inlined_call_operand.hbm [shape: f32[4,6,16,16], index: 1, kind: input, shape index: {}]
  %s2 = inlined_call_operand.vmem [shape: f32[4,10,22,22], index: 2, kind: output, shape index: {}]
  %s3 = sld [smem:[#allocation0]]
  $region75: #{tpu_custom_call.1} parent=0
    _
  %s5 = ssub.s32 1, %s3
  %s6 = scalar_select 0, %s5, %s3
  %s8 = sshll.u32 %s0, 4
  %s9 = int_to_ptr.hbm [resolvable:$true] %s8
  %11 = dma.hbm_to_smem %s9, 16, [#allocation3], [#allocation2]
  %13 = dma.done [#allocation2], 16
  %14 = sfence
  $region1: #{tpu_custom_call.1} parent=0
    #allocation4 [shape = 'u8[65536]{0}', space=vmem, size = 0x10000, scoped, tag = 'input window, operand 1']
    #allocation5 [shape = 's32[2]{0}', space=sflag, size = 0x8, scoped, tag = 'scoped memory for tpu_custom_call.1']
    #allocation6 [shape = 'u8[98304]{0}', space=vmem, size = 0x18000, scoped, tag = 'output window, operand 0']
    %15 = vsyncpa [#allocation5], 0
    %s16 = scalar_lea.sflag [#allocation5], 1
    %17 = vsyncpa %s16, 0
    loop: start=0, step=1, limit=12
    $region2: #{tpu_custom_call.1} parent=1 // loop_pre_header
      _
    $region3: #{tpu_custom_call.1} parent=1 // loop_header
      %s19 = sphi 0, %s23
      %p20 = scmp.ge.s32.totalorder %s19, 12
      %s26 = sphi 0, %s38
      %s27 = sphi 0, %s34
      %s28 = sphi 0, %s26
      %s29 = sphi 0, %s27
      %s30 = sphi 0, %s28
      %s31 = sphi 0, %s29
      %s45 = sphi 0, %s47
      %s48 = sphi 0, %s45
      %s49 = sphi 0, %s48
      %s65 = sphi 0, %s49
      %s73 = sphi 0, %s75
      %s76 = sphi 0, %s73
      %s77 = sphi 0, %s76
      %s93 = sphi 0, %s77
    $region4: #{tpu_custom_call.1} parent=1 // loop_header_branch
      %22 = sbr.rel (%p20) target = $region8
    $region5: #{tpu_custom_call.1} parent=1 // loop_body
      %s24 = ssub.s32 %s19, 1
      %s25 = ssub.s32 %s19, 2
      %s32 = sadd.s32 1, %s27
      %p33 = scmp.ge.s32.totalorder %s32, 10
      %s34 = scalar_select %p33, 0, %s32
      %s35 = sadd.s32 1, %s26
      %s36 = scalar_select %p33, %s35, %s26
      %p37 = scmp.ge.s32.totalorder %s36, 1
      %s38 = scalar_select %p37, 0, %s36
      %s39 = sld [smem:[#allocation3 + %s27]]
      %s40 = sld [smem:[#allocation3 + %s34]]
      %s41 = ssub.s32 %s26, %s38
      %s42 = ssub.s32 %s39, %s40
      %s43 = sor.u32 %s41, %s42
      %p44 = scmp.eq.s32.totalorder %s43, 0
      %s46 = sadd.s32 %s45, 1
      %s47 = scalar_select %p44, %s45, %s46
      %p50 = pneg %p44
      %p51 = scmp.eq.s32.totalorder %s19, 9
      %p52 = por %p50, %p51
      %p53 = scmp.ne.s32.totalorder %s45, %s48
      %p54 = scmp.eq.s32.totalorder %s19, 0
      %p55 = por %p53, %p54
      %p56 = scmp.ne.s32.totalorder %s45, %s48
      %p57 = scmp.eq.s32.totalorder %s24, 9
      %p58 = por %p56, %p57
      %p59 = scmp.ne.s32.totalorder %s48, %s49
      %p60 = scmp.eq.s32.totalorder %s24, 0
      %p61 = por %p59, %p60
      %p62 = scmp.ne.s32.totalorder %s48, %s49
      %p63 = scmp.eq.s32.totalorder %s25, 9
      %p64 = por %p62, %p63
      %p66 = scmp.ne.s32.totalorder %s49, %s65
      %p67 = scmp.eq.s32.totalorder %s25, 0
      %p68 = por %p66, %p67
      %s69 = ssub.s32 %s26, %s38
      %s70 = ssub.s32 %s27, %s34
      %s71 = sor.u32 %s69, %s70
      %p72 = scmp.eq.s32.totalorder %s71, 0
      %s74 = sadd.s32 %s73, 1
      %s75 = scalar_select %p72, %s73, %s74
      %p78 = pneg %p72
      %p79 = scmp.eq.s32.totalorder %s19, 9
      %p80 = por %p78, %p79
      %p81 = scmp.ne.s32.totalorder %s73, %s76
      %p82 = scmp.eq.s32.totalorder %s19, 0
      %p83 = por %p81, %p82
      %p84 = scmp.ne.s32.totalorder %s73, %s76
      %p85 = scmp.eq.s32.totalorder %s24, 9
      %p86 = por %p84, %p85
      %p87 = scmp.ne.s32.totalorder %s76, %s77
      %p88 = scmp.eq.s32.totalorder %s24, 0
      %p89 = por %p87, %p88
      %p90 = scmp.ne.s32.totalorder %s76, %s77
      %p91 = scmp.eq.s32.totalorder %s25, 9
      %p92 = por %p90, %p91
      %p94 = scmp.ne.s32.totalorder %s77, %s93
      %p95 = scmp.eq.s32.totalorder %s25, 0
      %p96 = por %p94, %p95
      %p97 = scmp.le.s32.totalorder 1, %s19
      %p98 = scmp.lt.s32.totalorder %s19, 11
      %p99 = pnand %p97, %p98
      %p100 = pneg %p99
      // Predicated region
      $region9: #{tpu_custom_call.1} parent=5 // pred_check
        _
      $region10: #{tpu_custom_call.1} parent=5 // pred_check_branch
        %102 = sbr.rel (%p99) target = $region12
      $region11: #{tpu_custom_call.1} parent=5 // pred_region
        %s103 = ssub.s32 %s19, 1
      $region12: #{tpu_custom_call.1} parent=5 // pred_fallthru
        _
      %p104 = scmp.lt.s32.totalorder %s19, 10
      // Predicated region
      $region13: #{tpu_custom_call.1} parent=5 // pred_check
        %p105 = pneg %p104
      $region14: #{tpu_custom_call.1} parent=5 // pred_check_branch
        %107 = sbr.rel (%p105) target = $region16
      $region15: #{tpu_custom_call.1} parent=5 // pred_region
        // Predicated region
        $region17: #{tpu_custom_call.1} parent=15 // pred_check
          %p108 = pneg %p55
        $region18: #{tpu_custom_call.1} parent=15 // pred_check_branch
          %110 = sbr.rel (%p108) target = $region20
        $region19: #{tpu_custom_call.1} parent=15 // pred_region
          #allocation8 [shape = 'u32[6]{0}', space=smem, size = 0x18, scoped, tag = 'DMA stride descriptor']
          %s111 = sand.u32 %s45, 1
          %s112 = scalar_lea.sflag [#allocation5], %s111
          %s113 = sand.u32 %s45, 1
          %s114 = smul.addr %s113, 64
          %s115 = scalar_lea.vmem [#allocation4], %s114
          %s116 = sld [smem:[#allocation3 + %s27]]
          %s117 = smul.u32 4, %s26
          %119 = vsyncadd %s112, 0
          %s120 = smul.addr %s116, 2
          %s121 = smul.addr %s117, 12
          %s122 = sadd.s32 %s120, %s121
          %s123 = smul.addr %s122, 8
          %s124 = scalar_lea.hbm %s1, %s123
          %s126 = sshll.u32 1, 14
          %s127 = sxor.u32 4294967295, %s126
          %s129 = sld [smem:[#allocation0]]
          %s130 = sadd.s32 2, %s129
          %s132 = sshll.u32 7, 26
          %s133 = sxor.u32 4294967295, %s132
          %s134 = sand.u32 0, %s133
          %s135 = sshll.u32 %s130, 26
          %s136 = sor.u32 %s134, %s135
          %s137 = sshll.u32 %s124, 4
          %s138 = int_to_ptr.hbm [resolvable:$true] %s137
          %s139 = sshll.u32 %s115, 4
          %s140 = int_to_ptr.vmem [resolvable:$true] %s139
          %146 = sst [smem:[#allocation8]] 1536
          %s147 = scalar_lea.smem [#allocation8], 1
          %148 = sst [smem:[%s147]] 256
          %s149 = scalar_lea.smem [#allocation8], 2
          %150 = sst [smem:[%s149]] 2
          %s151 = scalar_lea.smem [#allocation8], 3
          %152 = sst [smem:[%s151]] 128
          %s153 = scalar_lea.smem [#allocation8], 4
          %154 = sst [smem:[%s153]] 128
          %s155 = scalar_lea.smem [#allocation8], 5
          %156 = sst [smem:[%s155]] 8
          %158 = dma.general %s138, 1024, %s140, %s112, [#allocation7], [#allocation8], %s136, 0
        $region20: #{tpu_custom_call.1} parent=15 // pred_fallthru
          _
      $region16: #{tpu_custom_call.1} parent=5 // pred_fallthru
        _
      %p159 = scmp.le.s32.totalorder 1, %s19
      %p160 = scmp.lt.s32.totalorder %s19, 11
      %p161 = pnand %p159, %p160
      %p162 = pneg %p161
      // Predicated region
      $region21: #{tpu_custom_call.1} parent=5 // pred_check
        _
      $region22: #{tpu_custom_call.1} parent=5 // pred_check_branch
        %164 = sbr.rel (%p161) target = $region24
      $region23: #{tpu_custom_call.1} parent=5 // pred_region
        %s165 = ssub.s32 %s19, 1
        %s166 = sand.u32 %s48, 1
        %s167 = scalar_lea.sflag [#allocation5], %s166
        %s168 = sand.u32 %s48, 1
        %s169 = smul.addr %s168, 64
        %s170 = scalar_lea.vmem [#allocation4], %s169
        // Predicated region
        $region25: #{tpu_custom_call.1} parent=23 // pred_check
          %p171 = pneg %p61
        $region26: #{tpu_custom_call.1} parent=23 // pred_check_branch
          %173 = sbr.rel (%p171) target = $region28
        $region27: #{tpu_custom_call.1} parent=23 // pred_region
          %175 = dma.done %s167, 1024
        $region28: #{tpu_custom_call.1} parent=23 // pred_fallthru
          _
        %s176 = sand.u32 %s48, 1
        %s177 = scalar_lea.sflag [#allocation5], %s176
        %s178 = sand.u32 %s48, 1
        %s179 = smul.addr %s178, 64
        %s180 = scalar_lea.vmem [#allocation4], %s179
        %p181 = pneg %p61
        %p182 = pneg %p58
        %p183 = pneg %p89
        %p184 = pneg %p86
        %s185 = sand.u32 %s76, 1
        %s186 = sand.u32 %s76, 1
        %s187 = smul.addr %s186, 96
        %s188 = scalar_lea.vmem [#allocation6], %s187
        %s189 = sld [smem:[#allocation3 + %s29]]
        %s190 = smul.u32 4, %s28
        %s191 = smul.u32 4, %s28
        %v192 = vld [vmem:[%s170] sm:$0xff]
        %v193 = vld [vmem:[%s170 + $0x8] sm:$0xff]
        %v194 = vld [vmem:[%s170 + $0x10] sm:$0xff]
        %v195 = vld [vmem:[%s170 + $0x18] sm:$0xff]
        %v196 = vld [vmem:[%s170 + $0x20] sm:$0xff]
        %v197 = vld [vmem:[%s170 + $0x28] sm:$0xff]
        %v198 = vld [vmem:[%s170 + $0x30] sm:$0xff]
        %v199 = vld [vmem:[%s170 + $0x38] sm:$0xff]
        %v204 = vrot.slane %v192, 3
        %v205 = vrot.slane %v194, 3
        %v206 = vrot.slane %v196, 3
        %v207 = vrot.slane %v198, 3
        %v212 = vrot.slane %v192, 1
        %v213 = vrot.slane %v194, 1
        %v214 = vrot.slane %v196, 1
        %v215 = vrot.slane %v198, 1
        %v220 = vrot.slane %v192, 7
        %v221 = vrot.slane %v194, 7
        %v222 = vrot.slane %v196, 7
        %v223 = vrot.slane %v198, 7
        %vm232 = vcmask 1042432
        %v233 = vrot.slane %v192, 5
        %v234 = vrot.slane %v193, 5
        %v235 = vsel %vm232, %v233, %v234
        %v236 = vrot.slane %v194, 5
        %v237 = vrot.slane %v195, 5
        %v238 = vsel %vm232, %v236, %v237
        %v239 = vrot.slane %v196, 5
        %v240 = vrot.slane %v197, 5
        %v241 = vsel %vm232, %v239, %v240
        %v242 = vrot.slane %v198, 5
        %v243 = vrot.slane %v199, 5
        %v244 = vsel %vm232, %v242, %v243
        %v253 = vrot.slane %v193, 3
        %v254 = vrot.slane %v195, 3
        %v255 = vrot.slane %v197, 3
        %v256 = vrot.slane %v199, 3
        %v261 = vrot.slane %v193, 1
        %v262 = vrot.slane %v195, 1
        %v263 = vrot.slane %v197, 1
        %v264 = vrot.slane %v199, 1
        %v269 = vrot.slane %v193, 7
        %v270 = vrot.slane %v195, 7
        %v271 = vrot.slane %v197, 7
        %v272 = vrot.slane %v199, 7
        %vm277 = vcmask 1040384
        %v278 = vsel %vm277, %v204, %v212
        %v279 = vsel %vm277, %v205, %v213
        %v280 = vsel %vm277, %v206, %v214
        %v281 = vsel %vm277, %v207, %v215
        %vm282 = vcmask 1041408
        %v283 = vsel %vm282, %v278, %v220
        %v284 = vsel %vm282, %v279, %v221
        %v285 = vsel %vm282, %v280, %v222
        %v286 = vsel %vm282, %v281, %v223
        %v287 = vsel %vm232, %v283, %v233
        %v288 = vsel %vm232, %v284, %v236
        %v289 = vsel %vm232, %v285, %v239
        %v290 = vsel %vm232, %v286, %v242
        %v291 = vsel %vm232, %v234, %v253
        %v292 = vsel %vm232, %v237, %v254
        %v293 = vsel %vm232, %v240, %v255
        %v294 = vsel %vm232, %v243, %v256
        %vm295 = vcmask 1043456
        %v296 = vsel %vm295, %v291, %v261
        %v297 = vsel %vm295, %v292, %v262
        %v298 = vsel %vm295, %v293, %v263
        %v299 = vsel %vm295, %v294, %v264
        %vm300 = vcmask 1044480
        %v301 = vsel %vm300, %v296, %v269
        %v302 = vsel %vm300, %v297, %v270
        %v303 = vsel %vm300, %v298, %v271
        %v304 = vsel %vm300, %v299, %v272
        %313 = vrot.lane.b32.xlu0 %v287, 125
        %v314 = vpop.permute.xlu0 %313
        %315 = vrot.lane.b32.xlu0 %v235, 125
        %v316 = vpop.permute.xlu0 %315
        %317 = vrot.lane.b32.xlu0 %v301, 125
        %v318 = vpop.permute.xlu0 %317
        %319 = vrot.lane.b32.xlu0 %v288, 125
        %v320 = vpop.permute.xlu0 %319
        %321 = vrot.lane.b32.xlu0 %v238, 125
        %v322 = vpop.permute.xlu0 %321
        %323 = vrot.lane.b32.xlu0 %v302, 125
        %v324 = vpop.permute.xlu0 %323
        %325 = vrot.lane.b32.xlu0 %v289, 125
        %v326 = vpop.permute.xlu0 %325
        %327 = vrot.lane.b32.xlu0 %v241, 125
        %v328 = vpop.permute.xlu0 %327
        %329 = vrot.lane.b32.xlu0 %v303, 125
        %v330 = vpop.permute.xlu0 %329
        %331 = vrot.lane.b32.xlu0 %v290, 125
        %v332 = vpop.permute.xlu0 %331
        %333 = vrot.lane.b32.xlu0 %v244, 125
        %v334 = vpop.permute.xlu0 %333
        %335 = vrot.lane.b32.xlu0 %v304, 125
        %v336 = vpop.permute.xlu0 %335
        %349 = vrot.lane.b32.xlu0 %v287, 127
        %v350 = vpop.permute.xlu0 %349
        %351 = vrot.lane.b32.xlu0 %v235, 127
        %v352 = vpop.permute.xlu0 %351
        %353 = vrot.lane.b32.xlu0 %v301, 127
        %v354 = vpop.permute.xlu0 %353
        %355 = vrot.lane.b32.xlu0 %v288, 127
        %v356 = vpop.permute.xlu0 %355
        %357 = vrot.lane.b32.xlu0 %v238, 127
        %v358 = vpop.permute.xlu0 %357
        %359 = vrot.lane.b32.xlu0 %v302, 127
        %v360 = vpop.permute.xlu0 %359
        %361 = vrot.lane.b32.xlu0 %v289, 127
        %v362 = vpop.permute.xlu0 %361
        %363 = vrot.lane.b32.xlu0 %v241, 127
        %v364 = vpop.permute.xlu0 %363
        %365 = vrot.lane.b32.xlu0 %v303, 127
        %v366 = vpop.permute.xlu0 %365
        %367 = vrot.lane.b32.xlu0 %v290, 127
        %v368 = vpop.permute.xlu0 %367
        %369 = vrot.lane.b32.xlu0 %v244, 127
        %v370 = vpop.permute.xlu0 %369
        %371 = vrot.lane.b32.xlu0 %v304, 127
        %v372 = vpop.permute.xlu0 %371
        %385 = vrot.lane.b32.xlu0 %v287, 1
        %v386 = vpop.permute.xlu0 %385
        %387 = vrot.lane.b32.xlu0 %v235, 1
        %v388 = vpop.permute.xlu0 %387
        %389 = vrot.lane.b32.xlu0 %v301, 1
        %v390 = vpop.permute.xlu0 %389
        %391 = vrot.lane.b32.xlu0 %v288, 1
        %v392 = vpop.permute.xlu0 %391
        %393 = vrot.lane.b32.xlu0 %v238, 1
        %v394 = vpop.permute.xlu0 %393
        %395 = vrot.lane.b32.xlu0 %v302, 1
        %v396 = vpop.permute.xlu0 %395
        %397 = vrot.lane.b32.xlu0 %v289, 1
        %v398 = vpop.permute.xlu0 %397
        %399 = vrot.lane.b32.xlu0 %v241, 1
        %v400 = vpop.permute.xlu0 %399
        %401 = vrot.lane.b32.xlu0 %v303, 1
        %v402 = vpop.permute.xlu0 %401
        %403 = vrot.lane.b32.xlu0 %v290, 1
        %v404 = vpop.permute.xlu0 %403
        %405 = vrot.lane.b32.xlu0 %v244, 1
        %v406 = vpop.permute.xlu0 %405
        %407 = vrot.lane.b32.xlu0 %v304, 1
        %v408 = vpop.permute.xlu0 %407
        %421 = vrot.lane.b32.xlu0 %v287, 3
        %v422 = vpop.permute.xlu0 %421
        %423 = vrot.lane.b32.xlu0 %v235, 3
        %v424 = vpop.permute.xlu0 %423
        %425 = vrot.lane.b32.xlu0 %v301, 3
        %v426 = vpop.permute.xlu0 %425
        %427 = vrot.lane.b32.xlu0 %v288, 3
        %v428 = vpop.permute.xlu0 %427
        %429 = vrot.lane.b32.xlu0 %v238, 3
        %v430 = vpop.permute.xlu0 %429
        %431 = vrot.lane.b32.xlu0 %v302, 3
        %v432 = vpop.permute.xlu0 %431
        %433 = vrot.lane.b32.xlu0 %v289, 3
        %v434 = vpop.permute.xlu0 %433
        %435 = vrot.lane.b32.xlu0 %v241, 3
        %v436 = vpop.permute.xlu0 %435
        %437 = vrot.lane.b32.xlu0 %v303, 3
        %v438 = vpop.permute.xlu0 %437
        %439 = vrot.lane.b32.xlu0 %v290, 3
        %v440 = vpop.permute.xlu0 %439
        %441 = vrot.lane.b32.xlu0 %v244, 3
        %v442 = vpop.permute.xlu0 %441
        %443 = vrot.lane.b32.xlu0 %v304, 3
        %v444 = vpop.permute.xlu0 %443
        %457 = vrot.lane.b32.xlu0 %v287, 5
        %v458 = vpop.permute.xlu0 %457
        %459 = vrot.lane.b32.xlu0 %v235, 5
        %v460 = vpop.permute.xlu0 %459
        %461 = vrot.lane.b32.xlu0 %v301, 5
        %v462 = vpop.permute.xlu0 %461
        %463 = vrot.lane.b32.xlu0 %v288, 5
        %v464 = vpop.permute.xlu0 %463
        %465 = vrot.lane.b32.xlu0 %v238, 5
        %v466 = vpop.permute.xlu0 %465
        %467 = vrot.lane.b32.xlu0 %v302, 5
        %v468 = vpop.permute.xlu0 %467
        %469 = vrot.lane.b32.xlu0 %v289, 5
        %v470 = vpop.permute.xlu0 %469
        %471 = vrot.lane.b32.xlu0 %v241, 5
        %v472 = vpop.permute.xlu0 %471
        %473 = vrot.lane.b32.xlu0 %v303, 5
        %v474 = vpop.permute.xlu0 %473
        %475 = vrot.lane.b32.xlu0 %v290, 5
        %v476 = vpop.permute.xlu0 %475
        %477 = vrot.lane.b32.xlu0 %v244, 5
        %v478 = vpop.permute.xlu0 %477
        %479 = vrot.lane.b32.xlu0 %v304, 5
        %v480 = vpop.permute.xlu0 %479
        %493 = vrot.lane.b32.xlu0 %v287, 7
        %v494 = vpop.permute.xlu0 %493
        %495 = vrot.lane.b32.xlu0 %v235, 7
        %v496 = vpop.permute.xlu0 %495
        %497 = vrot.lane.b32.xlu0 %v301, 7
        %v498 = vpop.permute.xlu0 %497
        %499 = vrot.lane.b32.xlu0 %v288, 7
        %v500 = vpop.permute.xlu0 %499
        %501 = vrot.lane.b32.xlu0 %v238, 7
        %v502 = vpop.permute.xlu0 %501
        %503 = vrot.lane.b32.xlu0 %v302, 7
        %v504 = vpop.permute.xlu0 %503
        %505 = vrot.lane.b32.xlu0 %v289, 7
        %v506 = vpop.permute.xlu0 %505
        %507 = vrot.lane.b32.xlu0 %v241, 7
        %v508 = vpop.permute.xlu0 %507
        %509 = vrot.lane.b32.xlu0 %v303, 7
        %v510 = vpop.permute.xlu0 %509
        %511 = vrot.lane.b32.xlu0 %v290, 7
        %v512 = vpop.permute.xlu0 %511
        %513 = vrot.lane.b32.xlu0 %v244, 7
        %v514 = vpop.permute.xlu0 %513
        %515 = vrot.lane.b32.xlu0 %v304, 7
        %v516 = vpop.permute.xlu0 %515
        %529 = vrot.lane.b32.xlu0 %v287, 9
        %v530 = vpop.permute.xlu0 %529
        %531 = vrot.lane.b32.xlu0 %v235, 9
        %v532 = vpop.permute.xlu0 %531
        %533 = vrot.lane.b32.xlu0 %v301, 9
        %v534 = vpop.permute.xlu0 %533
        %535 = vrot.lane.b32.xlu0 %v288, 9
        %v536 = vpop.permute.xlu0 %535
        %537 = vrot.lane.b32.xlu0 %v238, 9
        %v538 = vpop.permute.xlu0 %537
        %539 = vrot.lane.b32.xlu0 %v302, 9
        %v540 = vpop.permute.xlu0 %539
        %541 = vrot.lane.b32.xlu0 %v289, 9
        %v542 = vpop.permute.xlu0 %541
        %543 = vrot.lane.b32.xlu0 %v241, 9
        %v544 = vpop.permute.xlu0 %543
        %545 = vrot.lane.b32.xlu0 %v303, 9
        %v546 = vpop.permute.xlu0 %545
        %547 = vrot.lane.b32.xlu0 %v290, 9
        %v548 = vpop.permute.xlu0 %547
        %549 = vrot.lane.b32.xlu0 %v244, 9
        %v550 = vpop.permute.xlu0 %549
        %551 = vrot.lane.b32.xlu0 %v304, 9
        %v552 = vpop.permute.xlu0 %551
        %vm565 = vcmask 7168
        %v566 = vsel %vm565, %v314, %v350
        %v567 = vsel %vm565, %v316, %v352
        %v568 = vsel %vm565, %v318, %v354
        %v569 = vsel %vm565, %v320, %v356
        %v570 = vsel %vm565, %v322, %v358
        %v571 = vsel %vm565, %v324, %v360
        %v572 = vsel %vm565, %v326, %v362
        %v573 = vsel %vm565, %v328, %v364
        %v574 = vsel %vm565, %v330, %v366
        %v575 = vsel %vm565, %v332, %v368
        %v576 = vsel %vm565, %v334, %v370
        %v577 = vsel %vm565, %v336, %v372
        %vm578 = vcmask 15360
        %v579 = vsel %vm578, %v566, %v386
        %v580 = vsel %vm578, %v567, %v388
        %v581 = vsel %vm578, %v568, %v390
        %v582 = vsel %vm578, %v569, %v392
        %v583 = vsel %vm578, %v570, %v394
        %v584 = vsel %vm578, %v571, %v396
        %v585 = vsel %vm578, %v572, %v398
        %v586 = vsel %vm578, %v573, %v400
        %v587 = vsel %vm578, %v574, %v402
        %v588 = vsel %vm578, %v575, %v404
        %v589 = vsel %vm578, %v576, %v406
        %v590 = vsel %vm578, %v577, %v408
        %vm591 = vcmask 23552
        %v592 = vsel %vm591, %v579, %v422
        %v593 = vsel %vm591, %v580, %v424
        %v594 = vsel %vm591, %v581, %v426
        %v595 = vsel %vm591, %v582, %v428
        %v596 = vsel %vm591, %v583, %v430
        %v597 = vsel %vm591, %v584, %v432
        %v598 = vsel %vm591, %v585, %v434
        %v599 = vsel %vm591, %v586, %v436
        %v600 = vsel %vm591, %v587, %v438
        %v601 = vsel %vm591, %v588, %v440
        %v602 = vsel %vm591, %v589, %v442
        %v603 = vsel %vm591, %v590, %v444
        %vm604 = vcmask 154624
        %v605 = vsel %vm604, %v592, %v458
        %v606 = vsel %vm604, %v593, %v460
        %v607 = vsel %vm604, %v594, %v462
        %v608 = vsel %vm604, %v595, %v464
        %v609 = vsel %vm604, %v596, %v466
        %v610 = vsel %vm604, %v597, %v468
        %v611 = vsel %vm604, %v598, %v470
        %v612 = vsel %vm604, %v599, %v472
        %v613 = vsel %vm604, %v600, %v474
        %v614 = vsel %vm604, %v601, %v476
        %v615 = vsel %vm604, %v602, %v478
        %v616 = vsel %vm604, %v603, %v480
        %vm617 = vcmask 162816
        %v618 = vsel %vm617, %v605, %v494
        %v619 = vsel %vm617, %v606, %v496
        %v620 = vsel %vm617, %v607, %v498
        %v621 = vsel %vm617, %v608, %v500
        %v622 = vsel %vm617, %v609, %v502
        %v623 = vsel %vm617, %v610, %v504
        %v624 = vsel %vm617, %v611, %v506
        %v625 = vsel %vm617, %v612, %v508
        %v626 = vsel %vm617, %v613, %v510
        %v627 = vsel %vm617, %v614, %v512
        %v628 = vsel %vm617, %v615, %v514
        %v629 = vsel %vm617, %v616, %v516
        %vm630 = vcmask 171008
        %v631 = vsel %vm630, %v618, %v530
        %v632 = vsel %vm630, %v619, %v532
        %v633 = vsel %vm630, %v620, %v534
        %v634 = vsel %vm630, %v621, %v536
        %v635 = vsel %vm630, %v622, %v538
        %v636 = vsel %vm630, %v623, %v540
        %v637 = vsel %vm630, %v624, %v542
        %v638 = vsel %vm630, %v625, %v544
        %v639 = vsel %vm630, %v626, %v546
        %v640 = vsel %vm630, %v627, %v548
        %v641 = vsel %vm630, %v628, %v550
        %v642 = vsel %vm630, %v629, %v552
        %vm643 = vcmask 179200
        %644 = vst.msk [vmem:[%s188] sm:$0xff] %vm643, %v631
        %645 = vst.msk [vmem:[%s188 + $0x8] sm:$0xff] %vm643, %v632
        %vm646 = vcmask 177152
        %647 = vst.msk [vmem:[%s188 + $0x10] sm:$0x3f] %vm646, %v633
        %648 = vst.msk [vmem:[%s188 + $0x18] sm:$0xff] %vm643, %v634
        %649 = vst.msk [vmem:[%s188 + $0x20] sm:$0xff] %vm643, %v635
        %650 = vst.msk [vmem:[%s188 + $0x28] sm:$0x3f] %vm646, %v636
        %651 = vst.msk [vmem:[%s188 + $0x30] sm:$0xff] %vm643, %v637
        %652 = vst.msk [vmem:[%s188 + $0x38] sm:$0xff] %vm643, %v638
        %653 = vst.msk [vmem:[%s188 + $0x40] sm:$0x3f] %vm646, %v639
        %654 = vst.msk [vmem:[%s188 + $0x48] sm:$0xff] %vm643, %v640
        %655 = vst.msk [vmem:[%s188 + $0x50] sm:$0xff] %vm643, %v641
        %656 = vst.msk [vmem:[%s188 + $0x58] sm:$0x3f] %vm646, %v642
        %s657 = sand.u32 %s76, 1
        %s658 = sand.u32 %s76, 1
        %s659 = smul.addr %s658, 96
        %s660 = scalar_lea.vmem [#allocation6], %s659
        // Predicated region
        $region29: #{tpu_custom_call.1} parent=23 // pred_check
          %p661 = pneg %p86
        $region30: #{tpu_custom_call.1} parent=23 // pred_check_branch
          %663 = sbr.rel (%p661) target = $region32
        $region31: #{tpu_custom_call.1} parent=23 // pred_region
          %s664 = smul.u32 4, %s28
          %s665 = smul.addr %s29, 3
          %s666 = smul.addr %s664, 30
          %s667 = sadd.s32 %s665, %s666
          %s668 = smul.addr %s667, 8
          %s669 = scalar_lea.vmem %s2, %s668
          // Predicated region
          $region33: #{tpu_custom_call.1} parent=31 // pred_check
            _
          $region34: #{tpu_custom_call.1} parent=31 // pred_check_branch
            %671 = sbr.rel (0) target = $region36
          $region35: #{tpu_custom_call.1} parent=31 // pred_region
            // Predicated region
            $region37: #{tpu_custom_call.1} parent=35 // pred_check
              _
            $region38: #{tpu_custom_call.1} parent=35 // pred_check_branch
              %673 = sbr.rel (0) target = $region40
            $region39: #{tpu_custom_call.1} parent=35 // pred_region
              // Predicated region
              $region52: #{tpu_custom_call.1} parent=39 // pred_check
                _
              $region53: #{tpu_custom_call.1} parent=39 // pred_check_branch
                %711 = sbr.rel (0) target = $region55
              $region54: #{tpu_custom_call.1} parent=39 // pred_region
                loop: start=0, step=1, limit=1
                $region56: #{tpu_custom_call.1} parent=54 // loop_pre_header
                  _
                $region57: #{tpu_custom_call.1} parent=54 // loop_header
                  %s713 = sphi 0, %s717
                  %p714 = scmp.ge.s32.totalorder %s713, 1
                  %s718 = sphi %s660, %s660
                  %s719 = sphi %s669, %s669
                $region58: #{tpu_custom_call.1} parent=54 // loop_header_branch
                  %716 = sbr.rel (%p714) target = $region62
                $region59: #{tpu_custom_call.1} parent=54 // loop_body
                  %v720 = vld [vmem:[%s718] sm:$0xff]
                  %721 = vst [vmem:[%s719] sm:$0xff] %v720
                  %v722 = vld [vmem:[%s718 + $0x8] sm:$0xff]
                  %723 = vst [vmem:[%s719 + $0x8] sm:$0xff] %v722
                  %v724 = vld [vmem:[%s718 + $0x10] sm:$0xff]
                  %725 = vst [vmem:[%s719 + $0x10] sm:$0xff] %v724
                  %v726 = vld [vmem:[%s718 + $0x18] sm:$0xff]
                  %727 = vst [vmem:[%s719 + $0xf0] sm:$0xff] %v726
                  %v728 = vld [vmem:[%s718 + $0x20] sm:$0xff]
                  %729 = vst [vmem:[%s719 + $0xf8] sm:$0xff] %v728
                  %v730 = vld [vmem:[%s718 + $0x28] sm:$0xff]
                  %731 = vst [vmem:[%s719 + $0x100] sm:$0xff] %v730
                  %v732 = vld [vmem:[%s718 + $0x30] sm:$0xff]
                  %733 = vst [vmem:[%s719 + $0x1e0] sm:$0xff] %v732
                  %v734 = vld [vmem:[%s718 + $0x38] sm:$0xff]
                  %735 = vst [vmem:[%s719 + $0x1e8] sm:$0xff] %v734
                  %v736 = vld [vmem:[%s718 + $0x40] sm:$0xff]
                  %737 = vst [vmem:[%s719 + $0x1f0] sm:$0xff] %v736
                  %v738 = vld [vmem:[%s718 + $0x48] sm:$0xff]
                  %739 = vst [vmem:[%s719 + $0x2d0] sm:$0xff] %v738
                  %v740 = vld [vmem:[%s718 + $0x50] sm:$0xff]
                  %741 = vst [vmem:[%s719 + $0x2d8] sm:$0xff] %v740
                  %v742 = vld [vmem:[%s718 + $0x58] sm:$0xff]
                  %743 = vst [vmem:[%s719 + $0x2e0] sm:$0xff] %v742
                $region60: #{tpu_custom_call.1} parent=54 // loop_footer
                  %s717 = sadd.s32 1, %s713
                $region61: #{tpu_custom_call.1} parent=54 // loop_footer_branch
                  %712 = sbr.rel target = $region57
                $region62: #{tpu_custom_call.1} parent=54 // loop_exit
                  _
              $region55: #{tpu_custom_call.1} parent=39 // pred_fallthru
                _
              // Predicated region
              $region63: #{tpu_custom_call.1} parent=39 // pred_check
                _
              $region64: #{tpu_custom_call.1} parent=39 // pred_check_branch
                %745 = sbr.rel target = $region66
              $region65: #{tpu_custom_call.1} parent=39 // pred_region
                _
              $region66: #{tpu_custom_call.1} parent=39 // pred_fallthru
                _
            $region40: #{tpu_custom_call.1} parent=35 // pred_fallthru
              _
            // Predicated region
            $region41: #{tpu_custom_call.1} parent=35 // pred_check
              _
            $region42: #{tpu_custom_call.1} parent=35 // pred_check_branch
              %675 = sbr.rel target = $region44
            $region43: #{tpu_custom_call.1} parent=35 // pred_region
              %s677 = ssub.s32 256, 1
              loop: start=0, step=1, limit=1
              $region45: #{tpu_custom_call.1} parent=43 // loop_pre_header
                _
              $region46: #{tpu_custom_call.1} parent=43 // loop_header
                %s679 = sphi 0, %s683
                %p680 = scmp.ge.s32.totalorder %s679, 1
                %s684 = sphi %s660, %s660
                %s685 = sphi %s669, %s669
              $region47: #{tpu_custom_call.1} parent=43 // loop_header_branch
                %682 = sbr.rel (%p680) target = $region51
              $region48: #{tpu_custom_call.1} parent=43 // loop_body
                %v686 = vld [vmem:[%s684] sm:%s677]
                %687 = vst [vmem:[%s685] sm:%s677] %v686
                %v688 = vld [vmem:[%s684 + $0x8] sm:%s677]
                %689 = vst [vmem:[%s685 + $0x8] sm:%s677] %v688
                %v690 = vld [vmem:[%s684 + $0x10] sm:%s677]
                %691 = vst [vmem:[%s685 + $0x10] sm:%s677] %v690
                %v692 = vld [vmem:[%s684 + $0x18] sm:%s677]
                %693 = vst [vmem:[%s685 + $0xf0] sm:%s677] %v692
                %v694 = vld [vmem:[%s684 + $0x20] sm:%s677]
                %695 = vst [vmem:[%s685 + $0xf8] sm:%s677] %v694
                %v696 = vld [vmem:[%s684 + $0x28] sm:%s677]
                %697 = vst [vmem:[%s685 + $0x100] sm:%s677] %v696
                %v698 = vld [vmem:[%s684 + $0x30] sm:%s677]
                %699 = vst [vmem:[%s685 + $0x1e0] sm:%s677] %v698
                %v700 = vld [vmem:[%s684 + $0x38] sm:%s677]
                %701 = vst [vmem:[%s685 + $0x1e8] sm:%s677] %v700
                %v702 = vld [vmem:[%s684 + $0x40] sm:%s677]
                %703 = vst [vmem:[%s685 + $0x1f0] sm:%s677] %v702
                %v704 = vld [vmem:[%s684 + $0x48] sm:%s677]
                %705 = vst [vmem:[%s685 + $0x2d0] sm:%s677] %v704
                %v706 = vld [vmem:[%s684 + $0x50] sm:%s677]
                %707 = vst [vmem:[%s685 + $0x2d8] sm:%s677] %v706
                %v708 = vld [vmem:[%s684 + $0x58] sm:%s677]
                %709 = vst [vmem:[%s685 + $0x2e0] sm:%s677] %v708
              $region49: #{tpu_custom_call.1} parent=43 // loop_footer
                %s683 = sadd.s32 1, %s679
              $region50: #{tpu_custom_call.1} parent=43 // loop_footer_branch
                %678 = sbr.rel target = $region46
              $region51: #{tpu_custom_call.1} parent=43 // loop_exit
                _
            $region44: #{tpu_custom_call.1} parent=35 // pred_fallthru
              _
          $region36: #{tpu_custom_call.1} parent=31 // pred_fallthru
            _
          %746 = vnop
        $region32: #{tpu_custom_call.1} parent=23 // pred_fallthru
          _
      $region24: #{tpu_custom_call.1} parent=5 // pred_fallthru
        _
      %p747 = scmp.le.s32.totalorder 2, %s19
      // Predicated region
      $region67: #{tpu_custom_call.1} parent=5 // pred_check
        %p748 = pneg %p747
      $region68: #{tpu_custom_call.1} parent=5 // pred_check_branch
        %750 = sbr.rel (%p748) target = $region70
      $region69: #{tpu_custom_call.1} parent=5 // pred_region
        %s751 = ssub.s32 %s19, 2
        // Predicated region
        $region71: #{tpu_custom_call.1} parent=69 // pred_check
          %p752 = pneg %p92
        $region72: #{tpu_custom_call.1} parent=69 // pred_check_branch
          %754 = sbr.rel (%p752) target = $region74
        $region73: #{tpu_custom_call.1} parent=69 // pred_region
          %s755 = sand.u32 %s77, 1
          %s756 = sand.u32 %s77, 1
          %s757 = smul.addr %s756, 96
          %s758 = scalar_lea.vmem [#allocation6], %s757
        $region74: #{tpu_custom_call.1} parent=69 // pred_fallthru
          _
      $region70: #{tpu_custom_call.1} parent=5 // pred_fallthru
        _
    $region6: #{tpu_custom_call.1} parent=1 // loop_footer
      %s23 = sadd.s32 1, %s19
    $region7: #{tpu_custom_call.1} parent=1 // loop_footer_branch
      %18 = sbr.rel target = $region3
    $region8: #{tpu_custom_call.1} parent=1 // loop_exit
      _
    %759 = vsyncpa [#allocation5], 1
    %s760 = scalar_lea.sflag [#allocation5], 1
    %761 = vsyncpa %s760, 1

</llo_original>
